<compile_context>
chip_gen: v7x
topology: tpu7x:2x2x1
jax: 0.10.0
libtpu: 0.0.40
codegen_flags: <defaults>
</compile_context>

<pallas_src>
import math

import jax
import jax.numpy as jnp
from jax.experimental import pallas as pl
from jax.experimental.pallas import tpu as pltpu

# ------------------------- logical module configuration ----------------------
BATCH   = 16         # activation rows (>= 2 batch tiles -> 2 parallel grid steps)
IN_DIM  = 32         # fc1 in_features
HID_DIM = 64         # fc1 out_features / fc2 in_features
OUT_DIM = 32         # fc2 out_features

# ------------------------- padded / lane-dense layout ------------------------
LANE    = 128
HID_PAD = 128        # pad matmul N / K lane dims to one full MXU / vreg tile
OUT_PAD = 128
B_TILE  = 8          # one sublane tile of batch per grid step (256+ at real scale)

# Packed parameter buffer layout, shape (P_ROWS, 128); all offsets 8-aligned:
#   rows [0       , IN_DIM )            : W1 in (in, out) layout   (32 x 128)
#   rows [W2_ROW0 , W2_ROW0 + HID_PAD ) : W2 in (in, out) layout  (128 x 128)
#   rows [B1_ROW  , B1_ROW + 8 )        : b1 replicated over the 8-row block
#   rows [B2_ROW  , B2_ROW + 8 )        : b2 replicated over the 8-row block
W2_ROW0 = IN_DIM                     # 32
B1_ROW  = W2_ROW0 + HID_PAD          # 160
B2_ROW  = B1_ROW + 8                 # 168
P_ROWS  = B2_ROW + 8                 # 176


# ------------------------------- Pallas kernel --------------------------------
def _ddp_mlp_kernel(x_ref, p_ref, o_ref):
    """Fused Linear -> GELU(tanh) -> Linear for one batch tile.

    x_ref : (B_TILE, IN_DIM)   unpadded activations (IN_DIM = full array dim)
    p_ref : (P_ROWS, LANE)     packed params (single contiguous resident DMA)
    o_ref : (B_TILE, OUT_PAD)  lane-dense output tile (unmasked vst)
    """
    x = x_ref[...]

    # Static, sublane-aligned slices of the packed parameter buffer (free).
    w1 = p_ref[0:IN_DIM, :]                       # (IN_DIM,  HID_PAD)
    w2 = p_ref[W2_ROW0:W2_ROW0 + HID_PAD, :]      # (HID_PAD, OUT_PAD)
    b1 = p_ref[B1_ROW:B1_ROW + B_TILE, :]         # (B_TILE, HID_PAD) pre-replicated
    b2 = p_ref[B2_ROW:B2_ROW + B_TILE, :]         # (B_TILE, OUT_PAD) pre-replicated

    # y = x @ W1 + b1  — (in, out) weight layout: contraction is lhs[1] x rhs[0],
    # so the RHS feeds the MXU without any XLU relayout.  No broadcast needed
    # for the bias add (rows were replicated at pack time).
    h = jnp.dot(x, w1, preferred_element_type=jnp.float32) + b1

    # GELU, tanh approximation; h*h hoisted (saves one VALU mul per element).
    c = jnp.float32(math.sqrt(2.0 / math.pi))
    h2 = h * h
    h = 0.5 * h * (1.0 + jnp.tanh(c * (h + 0.044715 * h2 * h)))

    # y = h @ W2 + b2
    y = jnp.dot(h, w2, preferred_element_type=jnp.float32) + b2

    o_ref[...] = y.astype(o_ref.dtype)


# ----------------------- wrap-time parameter packing --------------------------
def pack_params(w1, b1, w2, b2):
    """One-time layout plumbing (analogous to DDP's bucket flattening):
    transpose PyTorch (out, in) weights to (in, out), zero-pad lane dims to
    128, replicate biases across their 8-row sublane block, and pack everything
    into one contiguous (P_ROWS, 128) f32 buffer (single resident VMEM DMA)."""
    buf = jnp.zeros((P_ROWS, LANE), jnp.float32)
    buf = buf.at[:IN_DIM, :HID_DIM].set(w1.T)                          # fc1 weight
    buf = buf.at[W2_ROW0:W2_ROW0 + HID_DIM, :OUT_DIM].set(w2.T)        # fc2 weight
    buf = buf.at[B1_ROW:B1_ROW + B_TILE, :HID_DIM].set(
        jnp.broadcast_to(b1, (B_TILE, HID_DIM)))                       # fc1 bias
    buf = buf.at[B2_ROW:B2_ROW + B_TILE, :OUT_DIM].set(
        jnp.broadcast_to(b2, (B_TILE, OUT_DIM)))                       # fc2 bias
    return buf


# ------------------------------ DDP forward -----------------------------------
def custom_ddp_forward_padded(x, packed_params):
    """Runs the wrapped module; returns the lane-padded (BATCH, OUT_PAD) output
    so production consumers can keep the padded layout (no extra HBM round trip
    for a slice)."""
    n_b = BATCH // B_TILE
    return pl.pallas_call(
        _ddp_mlp_kernel,
        out_shape=jax.ShapeDtypeStruct((BATCH, OUT_PAD), jnp.float32),
        grid=(n_b,),
        in_specs=[
            # Unpadded x: block last dim == full array dim (32), so legal.
            pl.BlockSpec((B_TILE, IN_DIM), lambda i: (i, 0)),
            # Packed params stay resident across grid steps (constant index).
            pl.BlockSpec((P_ROWS, LANE), lambda i: (0, 0)),
        ],
        out_specs=pl.BlockSpec((B_TILE, OUT_PAD), lambda i: (i, 0)),
        compiler_params=pltpu.CompilerParams(
            dimension_semantics=("parallel",),    # batch tiles -> both v7x TCs
            vmem_limit_bytes=32 * 1024 * 1024,
        ),
    )(x.astype(jnp.float32), packed_params)


def custom_ddp_forward(x, packed_params):
    """CustomDDP.forward(x): run the wrapped module.  The Reducer hooks are
    backward-only gradient all-reduce machinery — nothing to do in forward."""
    # TODO(synk): the Reducer's bucketized async all_reduce of gradients (and
    # grad /= world_size) is a multi-process backward-pass protocol with no
    # forward Pallas equivalent; a real implementation would use
    # pltpu.make_async_remote_copy + semaphores over a device mesh in a
    # custom backward kernel.
    out_pad = custom_ddp_forward_padded(x, packed_params)
    # Only to restore the module's logical output width for the check below;
    # production consumers should consume the padded layout directly.
    return out_pad[:, :OUT_DIM]


# ------------------------- deterministic param init ---------------------------
def build_params(key):
    k1, k2, k3, k4 = jax.random.split(key, 4)
    w1 = 0.02 * jax.random.normal(k1, (HID_DIM, IN_DIM), dtype=jnp.float32)
    b1 = 0.02 * jax.random.normal(k2, (HID_DIM,), dtype=jnp.float32)
    w2 = 0.02 * jax.random.normal(k3, (OUT_DIM, HID_DIM), dtype=jnp.float32)
    b2 = 0.02 * jax.random.normal(k4, (OUT_DIM,), dtype=jnp.float32)
    return w1, b1, w2, b2


def _reference_forward(x, w1, b1, w2, b2):
    h = x @ w1.T + b1
    c = math.sqrt(2.0 / math.pi)
    h = 0.5 * h * (1.0 + jnp.tanh(c * (h + 0.044715 * h**3)))
    return h @ w2.T + b2


# ----------------------------------- main --------------------------------------
if __name__ == "__main__":
    key = jax.random.PRNGKey(0)
    k_x, k_p = jax.random.split(key)

    x = jax.random.normal(k_x, (BATCH, IN_DIM), dtype=jnp.float32)
    w1, b1, w2, b2 = build_params(k_p)

    packed = pack_params(w1, b1, w2, b2)        # wrap-time packing (once)

    out = jax.jit(custom_ddp_forward)(x, packed)
    out = jax.block_until_ready(out)

    ref = _reference_forward(x, w1, b1, w2, b2)
    assert out.shape == (BATCH, OUT_DIM)
    assert jnp.allclose(out, ref, atol=2e-5, rtol=1e-4), "mismatch vs JAX reference"

    print("KERNEL_OK")
</pallas_src>

<mosaic_0001>
module attributes {stable_mosaic.version = 11 : i64} {
  func.func @_ddp_mlp_kernel(%arg0: i32, %arg1: memref<8x32xf32, #tpu.memory_space<vmem>>, %arg2: memref<176x128xf32, #tpu.memory_space<vmem>>, %arg3: memref<8x128xf32, #tpu.memory_space<vmem>>) attributes {dimension_semantics = [#tpu.dimension_semantics<parallel>], iteration_bounds = array<i64: 2>, scalar_prefetch = 0 : i64, scratch_operands = 0 : i64, tpu.core_type = #tpu.core_type<tc>, window_params = [{transform_indices = @transform_0, window_bounds = array<i64: 8, 32>}, {pipeline_mode = #tpu.pipeline_mode<synchronous>, transform_indices = @transform_1, window_bounds = array<i64: 176, 128>}, {transform_indices = @transform_2, window_bounds = array<i64: 8, 128>}]} {
    %c0 = arith.constant 0 : index
    %c0_0 = arith.constant 0 : index
    %0 = vector.load %arg1[%c0, %c0_0] : memref<8x32xf32, #tpu.memory_space<vmem>>, vector<8x32xf32>
    %c0_1 = arith.constant 0 : index
    %c0_2 = arith.constant 0 : index
    %1 = vector.load %arg2[%c0_1, %c0_2] : memref<176x128xf32, #tpu.memory_space<vmem>>, vector<32x128xf32>
    %c32 = arith.constant 32 : index
    %c0_3 = arith.constant 0 : index
    %2 = vector.load %arg2[%c32, %c0_3] : memref<176x128xf32, #tpu.memory_space<vmem>>, vector<128x128xf32>
    %c160 = arith.constant 160 : index
    %c0_4 = arith.constant 0 : index
    %3 = vector.load %arg2[%c160, %c0_4] : memref<176x128xf32, #tpu.memory_space<vmem>>, vector<8x128xf32>
    %c168 = arith.constant 168 : index
    %c0_5 = arith.constant 0 : index
    %4 = vector.load %arg2[%c168, %c0_5] : memref<176x128xf32, #tpu.memory_space<vmem>>, vector<8x128xf32>
    %cst = arith.constant dense<0.000000e+00> : vector<8x128xf32>
    %5 = tpu.matmul %0, %1, %cst {dimension_numbers = #tpu.dot_dimension_numbers<[1], [0], [0], [1], [0, 0, 1, 1], [], []>} : vector<8x32xf32>, vector<32x128xf32>, vector<8x128xf32> -> vector<8x128xf32>
    %6 = arith.addf %5, %3 : vector<8x128xf32>
    %7 = arith.mulf %6, %6 : vector<8x128xf32>
    %cst_6 = arith.constant 5.000000e-01 : f32
    %8 = vector.broadcast %cst_6 : f32 to vector<8x128xf32>
    %9 = arith.mulf %8, %6 : vector<8x128xf32>
    %cst_7 = arith.constant 4.471500e-02 : f32
    %10 = vector.broadcast %cst_7 : f32 to vector<8x128xf32>
    %11 = arith.mulf %10, %7 : vector<8x128xf32>
    %12 = arith.mulf %11, %6 : vector<8x128xf32>
    %13 = arith.addf %6, %12 : vector<8x128xf32>
    %cst_8 = arith.constant 0.797884583 : f32
    %14 = vector.broadcast %cst_8 : f32 to vector<8x128xf32>
    %15 = arith.mulf %14, %13 : vector<8x128xf32>
    %16 = math.tanh %15 : vector<8x128xf32>
    %cst_9 = arith.constant 1.000000e+00 : f32
    %17 = vector.broadcast %cst_9 : f32 to vector<8x128xf32>
    %18 = arith.addf %17, %16 : vector<8x128xf32>
    %19 = arith.mulf %9, %18 : vector<8x128xf32>
    %cst_10 = arith.constant dense<0.000000e+00> : vector<8x128xf32>
    %20 = tpu.matmul %19, %2, %cst_10 {dimension_numbers = #tpu.dot_dimension_numbers<[1], [0], [0], [1], [0, 0, 1, 1], [], []>} : vector<8x128xf32>, vector<128x128xf32>, vector<8x128xf32> -> vector<8x128xf32>
    %21 = arith.addf %20, %4 : vector<8x128xf32>
    %c0_11 = arith.constant 0 : index
    %c0_12 = arith.constant 0 : index
    %22 = vector.load %arg3[%c0_11, %c0_12] : memref<8x128xf32, #tpu.memory_space<vmem>>, vector<8x128xf32>
    tpu.vector_store %arg3[%c0_11, %c0_12], %21 {strides = array<i32>} : memref<8x128xf32, #tpu.memory_space<vmem>>, vector<8x128xf32>,
    return
  }
  func.func @transform_0(%arg0: i32) -> (i32, i32) {
    %c0_i32 = arith.constant 0 : i32
    %c0_i32_0 = arith.constant 0 : i32
    return %arg0, %c0_i32 : i32, i32
  }
  func.func @transform_1(%arg0: i32) -> (i32, i32) {
    %c0_i32 = arith.constant 0 : i32
    %c0_i32_0 = arith.constant 0 : i32
    %c0_i32_1 = arith.constant 0 : i32
    return %c0_i32, %c0_i32_0 : i32, i32
  }
  func.func @transform_2(%arg0: i32) -> (i32, i32) {
    %c0_i32 = arith.constant 0 : i32
    %c0_i32_0 = arith.constant 0 : i32
    return %arg0, %c0_i32 : i32, i32
  }
}

</mosaic_0001>

<llo_original>
// kernel: custom_ddp_forward.1
$region0: #{custom_ddp_forward.1}
  #allocation0 [shape = 'u32[]', space=smem, size = 0x4, offset = 0x4, fixed_abs, tag = 'smem constant byte address 0x4 - core index']
  #allocation1 [shape = 'u32[144,128]{1,0:T(1,128)}', space=vmem, size = 0x12000, scoped, tag = 'internal scratch']
  %s0 = inlined_call_operand.hbm [shape: f32[16,32], index: 0, kind: input, shape index: {}]
  %s1 = inlined_call_operand.hbm [shape: f32[176,128], index: 1, kind: input, shape index: {}]
  %s2 = inlined_call_operand.hbm [shape: f32[16,128], index: 2, kind: output, shape index: {}]
  %s3 = sld [smem:[#allocation0]]
  $region49: #{custom_ddp_forward.1} parent=0
    _
  %s5 = ssub.s32 1, %s3
  %s6 = scalar_select 0, %s5, %s3
  $region1: #{custom_ddp_forward.1} parent=0
    #allocation2 [shape = 'u8[8192]{0}', space=vmem, size = 0x2000, scoped, tag = 'input window, operand 0']
    #allocation3 [shape = 's32[2]{0}', space=sflag, size = 0x8, scoped, tag = 'scoped memory for custom_ddp_forward.1']
    #allocation4 [shape = 's32[2]{0}', space=sflag, size = 0x8, scoped, tag = 'scoped memory for custom_ddp_forward.1']
    #allocation5 [shape = 'u8[90112]{0}', space=vmem, size = 0x16000, scoped, tag = 'input window, operand 1, single buffered']
    #allocation6 [shape = 's32[1]{0}', space=sflag, size = 0x4, scoped, tag = 'scoped memory for custom_ddp_forward.1']
    #allocation7 [shape = 'u8[8192]{0}', space=vmem, size = 0x2000, scoped, tag = 'output window, operand 0']
    %7 = vsyncpa [#allocation3], 0
    %s8 = scalar_lea.sflag [#allocation3], 1
    %9 = vsyncpa %s8, 0
    %10 = vsyncpa [#allocation6], 0
    %11 = vsyncpa [#allocation4], 0
    %s12 = scalar_lea.sflag [#allocation4], 1
    %13 = vsyncpa %s12, 0
    loop: start=0, step=1, limit=4
    $region2: #{custom_ddp_forward.1} parent=1 // loop_pre_header
      _
    $region3: #{custom_ddp_forward.1} parent=1 // loop_header
      %s15 = sphi 0, %s19
      %p16 = scmp.ge.s32.totalorder %s15, 4
      %s25 = sphi 0, %s27
      %s28 = sphi 0, %s25
      %s29 = sphi 0, %s28
      %s45 = sphi 0, %s29
      %s49 = sphi 0, %s49
      %s51 = sphi 0, %s49
      %s52 = sphi 0, %s51
      %s66 = sphi 0, %s52
      %s72 = sphi 0, %s74
      %s75 = sphi 0, %s72
      %s76 = sphi 0, %s75
      %s92 = sphi 0, %s76
    $region4: #{custom_ddp_forward.1} parent=1 // loop_header_branch
      %18 = sbr.rel (%p16) target = $region8
    $region5: #{custom_ddp_forward.1} parent=1 // loop_body
      %s20 = ssub.s32 %s15, 1
      %s21 = ssub.s32 %s15, 2
      %s22 = sadd.s32 %s15, 1
      %s23 = ssub.s32 %s15, %s22
      %p24 = scmp.eq.s32.totalorder %s23, 0
      %s26 = sadd.s32 %s25, 1
      %s27 = scalar_select %p24, %s25, %s26
      %p30 = pneg %p24
      %p31 = scmp.eq.s32.totalorder %s15, 1
      %p32 = por %p30, %p31
      %p33 = scmp.ne.s32.totalorder %s25, %s28
      %p34 = scmp.eq.s32.totalorder %s15, 0
      %p35 = por %p33, %p34
      %p36 = scmp.ne.s32.totalorder %s25, %s28
      %p37 = scmp.eq.s32.totalorder %s20, 1
      %p38 = por %p36, %p37
      %p39 = scmp.ne.s32.totalorder %s28, %s29
      %p40 = scmp.eq.s32.totalorder %s20, 0
      %p41 = por %p39, %p40
      %p42 = scmp.ne.s32.totalorder %s28, %s29
      %p43 = scmp.eq.s32.totalorder %s21, 1
      %p44 = por %p42, %p43
      %p46 = scmp.ne.s32.totalorder %s29, %s45
      %p47 = scmp.eq.s32.totalorder %s21, 0
      %p48 = por %p46, %p47
      %s50 = sadd.s32 %s49, 1
      %p53 = scmp.eq.s32.totalorder %s15, 1
      %p54 = scmp.ne.s32.totalorder %s49, %s51
      %p55 = scmp.eq.s32.totalorder %s15, 0
      %p56 = por %p54, %p55
      %p57 = scmp.ne.s32.totalorder %s49, %s51
      %p58 = scmp.eq.s32.totalorder %s20, 1
      %p59 = por %p57, %p58
      %p60 = scmp.ne.s32.totalorder %s51, %s52
      %p61 = scmp.eq.s32.totalorder %s20, 0
      %p62 = por %p60, %p61
      %p63 = scmp.ne.s32.totalorder %s51, %s52
      %p64 = scmp.eq.s32.totalorder %s21, 1
      %p65 = por %p63, %p64
      %p67 = scmp.ne.s32.totalorder %s52, %s66
      %p68 = scmp.eq.s32.totalorder %s21, 0
      %p69 = por %p67, %p68
      %s70 = ssub.s32 %s15, %s22
      %p71 = scmp.eq.s32.totalorder %s70, 0
      %s73 = sadd.s32 %s72, 1
      %s74 = scalar_select %p71, %s72, %s73
      %p77 = pneg %p71
      %p78 = scmp.eq.s32.totalorder %s15, 1
      %p79 = por %p77, %p78
      %p80 = scmp.ne.s32.totalorder %s72, %s75
      %p81 = scmp.eq.s32.totalorder %s15, 0
      %p82 = por %p80, %p81
      %p83 = scmp.ne.s32.totalorder %s72, %s75
      %p84 = scmp.eq.s32.totalorder %s20, 1
      %p85 = por %p83, %p84
      %p86 = scmp.ne.s32.totalorder %s75, %s76
      %p87 = scmp.eq.s32.totalorder %s20, 0
      %p88 = por %p86, %p87
      %p89 = scmp.ne.s32.totalorder %s75, %s76
      %p90 = scmp.eq.s32.totalorder %s21, 1
      %p91 = por %p89, %p90
      %p93 = scmp.ne.s32.totalorder %s76, %s92
      %p94 = scmp.eq.s32.totalorder %s21, 0
      %p95 = por %p93, %p94
      %p96 = scmp.le.s32.totalorder 1, %s15
      %p97 = scmp.lt.s32.totalorder %s15, 3
      %p98 = pnand %p96, %p97
      %p99 = pneg %p98
      // Predicated region
      $region9: #{custom_ddp_forward.1} parent=5 // pred_check
        _
      $region10: #{custom_ddp_forward.1} parent=5 // pred_check_branch
        %101 = sbr.rel (%p98) target = $region12
      $region11: #{custom_ddp_forward.1} parent=5 // pred_region
        %s102 = ssub.s32 %s15, 1
        // Predicated region
        $region13: #{custom_ddp_forward.1} parent=11 // pred_check
          %p103 = pneg %p62
        $region14: #{custom_ddp_forward.1} parent=11 // pred_check_branch
          %105 = sbr.rel (%p103) target = $region16
        $region15: #{custom_ddp_forward.1} parent=11 // pred_region
          %s107 = ssub.s32 2816, 2816
          %108 = vsyncadd [#allocation6], %s107
          %s109 = sshll.u32 [#allocation5], 4
          %s110 = int_to_ptr.vmem [resolvable:$true] %s109
          %115 = dma.hbm_to_vmem [thread:$0]  %s1, 2816, %s110, [#allocation6], 128, 128, 8
        $region16: #{custom_ddp_forward.1} parent=11 // pred_fallthru
          _
      $region12: #{custom_ddp_forward.1} parent=5 // pred_fallthru
        _
      %p116 = scmp.lt.s32.totalorder %s15, 2
      // Predicated region
      $region17: #{custom_ddp_forward.1} parent=5 // pred_check
        %p117 = pneg %p116
      $region18: #{custom_ddp_forward.1} parent=5 // pred_check_branch
        %119 = sbr.rel (%p117) target = $region20
      $region19: #{custom_ddp_forward.1} parent=5 // pred_region
        // Predicated region
        $region21: #{custom_ddp_forward.1} parent=19 // pred_check
          %p120 = pneg %p35
        $region22: #{custom_ddp_forward.1} parent=19 // pred_check_branch
          %122 = sbr.rel (%p120) target = $region24
        $region23: #{custom_ddp_forward.1} parent=19 // pred_region
          %s123 = sand.u32 %s25, 1
          %s124 = scalar_lea.sflag [#allocation3], %s123
          %s125 = sand.u32 %s25, 1
          %s126 = smul.addr %s125, 8
          %s127 = scalar_lea.vmem [#allocation2], %s126
          %s129 = ssub.s32 128, 128
          %130 = vsyncadd %s124, %s129
          %s131 = smul.addr %s15, 128
          %s132 = scalar_lea.hbm %s0, %s131
          %s134 = sshll.u32 %s127, 4
          %s135 = int_to_ptr.vmem [resolvable:$true] %s134
          %137 = dma.hbm_to_vmem [thread:$0]  %s132, 128, %s135, %s124
        $region24: #{custom_ddp_forward.1} parent=19 // pred_fallthru
          _
      $region20: #{custom_ddp_forward.1} parent=5 // pred_fallthru
        _
      %p138 = scmp.le.s32.totalorder 1, %s15
      %p139 = scmp.lt.s32.totalorder %s15, 3
      %p140 = pnand %p138, %p139
      %p141 = pneg %p140
      // Predicated region
      $region25: #{custom_ddp_forward.1} parent=5 // pred_check
        _
      $region26: #{custom_ddp_forward.1} parent=5 // pred_check_branch
        %143 = sbr.rel (%p140) target = $region28
      $region27: #{custom_ddp_forward.1} parent=5 // pred_region
        %s144 = ssub.s32 %s15, 1
        %s145 = sand.u32 %s28, 1
        %s146 = scalar_lea.sflag [#allocation3], %s145
        %s147 = sand.u32 %s28, 1
        %s148 = smul.addr %s147, 8
        %s149 = scalar_lea.vmem [#allocation2], %s148
        // Predicated region
        $region29: #{custom_ddp_forward.1} parent=27 // pred_check
          %p150 = pneg %p41
        $region30: #{custom_ddp_forward.1} parent=27 // pred_check_branch
          %152 = sbr.rel (%p150) target = $region32
        $region31: #{custom_ddp_forward.1} parent=27 // pred_region
          %153 = dma.done %s146, 128
        $region32: #{custom_ddp_forward.1} parent=27 // pred_fallthru
          _
        // Predicated region
        $region33: #{custom_ddp_forward.1} parent=27 // pred_check
          %p154 = pneg %p62
        $region34: #{custom_ddp_forward.1} parent=27 // pred_check_branch
          %156 = sbr.rel (%p154) target = $region36
        $region35: #{custom_ddp_forward.1} parent=27 // pred_region
          %157 = dma.done [#allocation6], 2816
        $region36: #{custom_ddp_forward.1} parent=27 // pred_fallthru
          _
        %s158 = sand.u32 %s28, 1
        %s159 = scalar_lea.sflag [#allocation3], %s158
        %s160 = sand.u32 %s28, 1
        %s161 = smul.addr %s160, 8
        %s162 = scalar_lea.vmem [#allocation2], %s161
        %p163 = pneg %p41
        %p164 = pneg %p38
        %p165 = pneg %p62
        %p166 = pneg %p59
        %p167 = pneg %p88
        %p168 = pneg %p85
        %s169 = sand.u32 %s75, 1
        %s170 = scalar_lea.sflag [#allocation4], %s169
        %s171 = sand.u32 %s75, 1
        %s172 = smul.addr %s171, 8
        %s173 = scalar_lea.vmem [#allocation7], %s172
        %v174 = vld [vmem:[%s149] sm:$0xff]
        %v175 = vld [vmem:[#allocation5] sm:$0xff]
        %v176 = vld [vmem:[#allocation5 + $0x8] sm:$0xff]
        %v177 = vld [vmem:[#allocation5 + $0x10] sm:$0xff]
        %v178 = vld [vmem:[#allocation5 + $0x18] sm:$0xff]
        %v179 = vld [vmem:[#allocation5 + $0x20] sm:$0xff]
        %v180 = vld [vmem:[#allocation5 + $0x28] sm:$0xff]
        %v181 = vld [vmem:[#allocation5 + $0x30] sm:$0xff]
        %v182 = vld [vmem:[#allocation5 + $0x38] sm:$0xff]
        %v183 = vld [vmem:[#allocation5 + $0x40] sm:$0xff]
        %v184 = vld [vmem:[#allocation5 + $0x48] sm:$0xff]
        %v185 = vld [vmem:[#allocation5 + $0x50] sm:$0xff]
        %v186 = vld [vmem:[#allocation5 + $0x58] sm:$0xff]
        %v187 = vld [vmem:[#allocation5 + $0x60] sm:$0xff]
        %v188 = vld [vmem:[#allocation5 + $0x68] sm:$0xff]
        %v189 = vld [vmem:[#allocation5 + $0x70] sm:$0xff]
        %v190 = vld [vmem:[#allocation5 + $0x78] sm:$0xff]
        %v191 = vld [vmem:[#allocation5 + $0x80] sm:$0xff]
        %v192 = vld [vmem:[#allocation5 + $0x88] sm:$0xff]
        %v193 = vld [vmem:[#allocation5 + $0x90] sm:$0xff]
        %v194 = vld [vmem:[#allocation5 + $0x98] sm:$0xff]
        %v195 = vld [vmem:[#allocation5 + $0xa0] sm:$0xff]
        %v196 = vld [vmem:[#allocation5 + $0xa8] sm:$0xff]
        %vm197 = vcmask 261120
        %v199 = vsel %vm197, %v174, 0
        %201 = vmatprep.subr.mxu0 0.0
        %202 = vmatpush1.msra.mxu0 %v175
        %203 = vmatprep.subr.mxu0 0.0
        %204 = vmatpush1.msra.mxu0 %v176
        %205 = vmatprep.subr.mxu0 0.0
        %206 = vmatpush1.msra.mxu0 %v177
        %207 = vmatprep.subr.mxu0 0.0
        %208 = vmatpush1.msra.mxu0 %v178
        %209 = vmatprep.subr.mxu0 0.0
        %210 = vmatpush1.msra.mxu0 0.0
        %211 = vmatprep.subr.mxu0 0.0
        %212 = vmatpush1.msra.mxu0 0.0
        %213 = vmatprep.subr.mxu0 0.0
        %214 = vmatpush1.msra.mxu0 0.0
        %215 = vmatprep.subr.mxu0 0.0
        %216 = vmatpush1.msra.mxu0 0.0
        %217 = vmatprep.subr.mxu0 0.0
        %218 = vmatpush1.msra.mxu0 0.0
        %219 = vmatprep.subr.mxu0 0.0
        %220 = vmatpush1.msra.mxu0 0.0
        %221 = vmatprep.subr.mxu0 0.0
        %222 = vmatpush1.msra.mxu0 0.0
        %223 = vmatprep.subr.mxu0 0.0
        %224 = vmatpush1.msra.mxu0 0.0
        %225 = vmatprep.subr.mxu0 0.0
        %226 = vmatpush1.msra.mxu0 0.0
        %227 = vmatprep.subr.mxu0 0.0
        %228 = vmatpush1.msra.mxu0 0.0
        %229 = vmatprep.subr.mxu0 0.0
        %230 = vmatpush1.msra.mxu0 0.0
        %231 = vmatprep.subr.mxu0 0.0
        %232 = vmatpush1.msra.mxu0 0.0
        %233 = vmatprep.subr.mxu0 0.0
        %234 = vmatpush1.msra.mxu0 0.0
        %235 = vmatprep.subr.mxu0 0.0
        %236 = vmatpush1.msra.mxu0 0.0
        %237 = vmatprep.subr.mxu0 0.0
        %238 = vmatpush1.msra.mxu0 0.0
        %239 = vmatprep.subr.mxu0 0.0
        %240 = vmatpush1.msra.mxu0 0.0
        %241 = vmatprep.subr.mxu0 0.0
        %242 = vmatpush1.msra.mxu0 0.0
        %243 = vmatprep.subr.mxu0 0.0
        %244 = vmatpush1.msra.mxu0 0.0
        %245 = vmatprep.subr.mxu0 0.0
        %246 = vmatpush1.msra.mxu0 0.0
        %247 = vmatprep.subr.mxu0 0.0
        %248 = vmatpush1.msra.mxu0 0.0
        %249 = vmatprep.subr.mxu0 0.0
        %250 = vmatpush1.msra.mxu0 0.0
        %251 = vmatprep.subr.mxu0 0.0
        %252 = vmatpush1.msra.mxu0 0.0
        %253 = vmatprep.subr.mxu0 0.0
        %254 = vmatpush1.msra.mxu0 0.0
        %255 = vmatprep.subr.mxu0 0.0
        %256 = vmatpush1.msra.mxu0 0.0
        %257 = vmatprep.subr.mxu0 0.0
        %258 = vmatpush1.msra.mxu0 0.0
        %259 = vmatprep.subr.mxu0 0.0
        %260 = vmatpush1.msra.mxu0 0.0
        %261 = vmatprep.subr.mxu0 0.0
        %262 = vmatpush1.msra.mxu0 0.0
        %263 = vmatprep.subr.mxu0 0.0
        %264 = vmatpush1.msra.mxu0 0.0
        %265 = vmatprep.mubr.f32.mxu0 0.0
        %266 = vmatmul.mubr.f32.gmra.mrb[0].mxu0 %v199
        %v267 = vpop.f32.mrb[0].mxu0
        %v268 = vadd.f32 %v195, %v267
        %v269 = vpop.f32.mrb[0].mxu0
        %270 = vdwg.mxu0
        %v271 = vmul.f32 %v268, %v268
        %v272 = vmul.f32 %v268, 0.5
        %v273 = vmul.f32 %v271, 0.044715
        %v274 = vmul.f32 %v273, %v268
        %v275 = vadd.f32 %v268, %v274
        %v276 = vmul.f32 %v275, 0.7978846
        %v277 = vtanh.pop %v276
        %v278 = vadd.f32 %v277, 1.0
        %v279 = vmul.f32 %v272, %v278
        %280 = vmatprep.subr.mxu0 0.0
        %281 = vmatpush1.msra.mxu0 %v179
        %282 = vmatprep.subr.mxu0 0.0
        %283 = vmatpush1.msra.mxu0 %v180
        %284 = vmatprep.subr.mxu0 0.0
        %285 = vmatpush1.msra.mxu0 %v181
        %286 = vmatprep.subr.mxu0 0.0
        %287 = vmatpush1.msra.mxu0 %v182
        %288 = vmatprep.subr.mxu0 0.0
        %289 = vmatpush1.msra.mxu0 %v183
        %290 = vmatprep.subr.mxu0 0.0
        %291 = vmatpush1.msra.mxu0 %v184
        %292 = vmatprep.subr.mxu0 0.0
        %293 = vmatpush1.msra.mxu0 %v185
        %294 = vmatprep.subr.mxu0 0.0
        %295 = vmatpush1.msra.mxu0 %v186
        %296 = vmatprep.subr.mxu0 0.0
        %297 = vmatpush1.msra.mxu0 %v187
        %298 = vmatprep.subr.mxu0 0.0
        %299 = vmatpush1.msra.mxu0 %v188
        %300 = vmatprep.subr.mxu0 0.0
        %301 = vmatpush1.msra.mxu0 %v189
        %302 = vmatprep.subr.mxu0 0.0
        %303 = vmatpush1.msra.mxu0 %v190
        %304 = vmatprep.subr.mxu0 0.0
        %305 = vmatpush1.msra.mxu0 %v191
        %306 = vmatprep.subr.mxu0 0.0
        %307 = vmatpush1.msra.mxu0 %v192
        %308 = vmatprep.subr.mxu0 0.0
        %309 = vmatpush1.msra.mxu0 %v193
        %310 = vmatprep.subr.mxu0 0.0
        %311 = vmatpush1.msra.mxu0 %v194
        %312 = vmatprep.subr.mxu0 0.0
        %313 = vmatpush1.msra.mxu0 0.0
        %314 = vmatprep.subr.mxu0 0.0
        %315 = vmatpush1.msra.mxu0 0.0
        %316 = vmatprep.subr.mxu0 0.0
        %317 = vmatpush1.msra.mxu0 0.0
        %318 = vmatprep.subr.mxu0 0.0
        %319 = vmatpush1.msra.mxu0 0.0
        %320 = vmatprep.subr.mxu0 0.0
        %321 = vmatpush1.msra.mxu0 0.0
        %322 = vmatprep.subr.mxu0 0.0
        %323 = vmatpush1.msra.mxu0 0.0
        %324 = vmatprep.subr.mxu0 0.0
        %325 = vmatpush1.msra.mxu0 0.0
        %326 = vmatprep.subr.mxu0 0.0
        %327 = vmatpush1.msra.mxu0 0.0
        %328 = vmatprep.subr.mxu0 0.0
        %329 = vmatpush1.msra.mxu0 0.0
        %330 = vmatprep.subr.mxu0 0.0
        %331 = vmatpush1.msra.mxu0 0.0
        %332 = vmatprep.subr.mxu0 0.0
        %333 = vmatpush1.msra.mxu0 0.0
        %334 = vmatprep.subr.mxu0 0.0
        %335 = vmatpush1.msra.mxu0 0.0
        %336 = vmatprep.subr.mxu0 0.0
        %337 = vmatpush1.msra.mxu0 0.0
        %338 = vmatprep.subr.mxu0 0.0
        %339 = vmatpush1.msra.mxu0 0.0
        %340 = vmatprep.subr.mxu0 0.0
        %341 = vmatpush1.msra.mxu0 0.0
        %342 = vmatprep.subr.mxu0 0.0
        %343 = vmatpush1.msra.mxu0 0.0
        %344 = vmatprep.mubr.f32.mxu0 0.0
        %345 = vmatmul.mubr.f32.gmra.mrb[0].mxu0 %v279
        %v346 = vpop.f32.mrb[0].mxu0
        %v347 = vadd.f32 %v196, %v346
        %v348 = vpop.f32.mrb[0].mxu0
        %349 = vdwg.mxu0
        %350 = vst [vmem:[%s173] sm:$0xff] %v347
        %s351 = sand.u32 %s75, 1
        %s352 = scalar_lea.sflag [#allocation4], %s351
        %s353 = sand.u32 %s75, 1
        %s354 = smul.addr %s353, 8
        %s355 = scalar_lea.vmem [#allocation7], %s354
        // Predicated region
        $region37: #{custom_ddp_forward.1} parent=27 // pred_check
          %p356 = pneg %p85
        $region38: #{custom_ddp_forward.1} parent=27 // pred_check_branch
          %358 = sbr.rel (%p356) target = $region40
        $region39: #{custom_ddp_forward.1} parent=27 // pred_region
          %s360 = ssub.s32 128, 128
          %361 = vsyncadd %s352, %s360
          %s362 = smul.addr %s20, 128
          %s363 = scalar_lea.hbm %s2, %s362
          %s365 = sshll.u32 %s355, 4
          %s366 = int_to_ptr.vmem [resolvable:$true] %s365
          %368 = dma.vmem_to_hbm [thread:$0]  %s366, 128, %s363, %s352
        $region40: #{custom_ddp_forward.1} parent=27 // pred_fallthru
          _
      $region28: #{custom_ddp_forward.1} parent=5 // pred_fallthru
        _
      %p369 = scmp.le.s32.totalorder 2, %s15
      // Predicated region
      $region41: #{custom_ddp_forward.1} parent=5 // pred_check
        %p370 = pneg %p369
      $region42: #{custom_ddp_forward.1} parent=5 // pred_check_branch
        %372 = sbr.rel (%p370) target = $region44
      $region43: #{custom_ddp_forward.1} parent=5 // pred_region
        %s373 = ssub.s32 %s15, 2
        // Predicated region
        $region45: #{custom_ddp_forward.1} parent=43 // pred_check
          %p374 = pneg %p91
        $region46: #{custom_ddp_forward.1} parent=43 // pred_check_branch
          %376 = sbr.rel (%p374) target = $region48
        $region47: #{custom_ddp_forward.1} parent=43 // pred_region
          %s377 = sand.u32 %s76, 1
          %s378 = scalar_lea.sflag [#allocation4], %s377
          %s379 = sand.u32 %s76, 1
          %s380 = smul.addr %s379, 8
          %s381 = scalar_lea.vmem [#allocation7], %s380
          %382 = dma.done %s378, 128
        $region48: #{custom_ddp_forward.1} parent=43 // pred_fallthru
          _
      $region44: #{custom_ddp_forward.1} parent=5 // pred_fallthru
        _
    $region6: #{custom_ddp_forward.1} parent=1 // loop_footer
      %s19 = sadd.s32 1, %s15
    $region7: #{custom_ddp_forward.1} parent=1 // loop_footer_branch
      %14 = sbr.rel target = $region3
    $region8: #{custom_ddp_forward.1} parent=1 // loop_exit
      _
    %383 = vsyncpa [#allocation3], 1
    %s384 = scalar_lea.sflag [#allocation3], 1
    %385 = vsyncpa %s384, 1
    %386 = vsyncpa [#allocation6], 1
    %387 = vsyncpa [#allocation4], 1
    %s388 = scalar_lea.sflag [#allocation4], 1
    %389 = vsyncpa %s388, 1

</llo_original>
